<compile_context>
chip_gen: v5e
topology: v5e:2x2
jax: 0.10.0
libtpu: 0.0.40
codegen_flags: <defaults>
</compile_context>

<pallas_src>
import math

import jax
import jax.numpy as jnp
from jax.experimental import pallas as pl
from jax.experimental.pallas import tpu as pltpu

_TWO_PI = 2.0 * math.pi
_INV_TWO_PI = 1.0 / _TWO_PI


def _angle_normalize(x):
    # (x + pi) % (2*pi) - pi, expressed with floor to avoid a divide.
    # jnp.mod(a, b) == a - b*floor(a/b), so this matches torch's float
    # remainder semantics (result follows sign of divisor).
    return x - _TWO_PI * jnp.floor((x + math.pi) * _INV_TWO_PI)


def _pendulum_kernel(state_ref, action_ref, state_out_ref, reward_out_ref):
    # state_ref:  (2, BN)  rows = [theta, theta_dot], batch on lanes
    # action_ref: (1, BN)
    dt = 0.05
    # g=10, m=1, l=1 folded with dt; sin(th+pi) == -sin(th) absorbed into sign.
    c_sin = 0.75   # (3*g / (2*l)) * dt
    c_u = 0.15     # (3 / (m*l**2)) * dt

    th = state_ref[0:1, :]       # (1, BN)
    thdot = state_ref[1:2, :]    # (1, BN)
    u = action_ref[...]          # (1, BN)

    newthdot = thdot + c_sin * jnp.sin(th) + c_u * u
    newth = th + newthdot * dt

    # Single unmasked store of the full (2, BN) output tile.
    state_out_ref[...] = jnp.concatenate((_angle_normalize(newth), newthdot),
                                         axis=0)

    # reward = -costs = -(0.5/20) * (an(th)^2 + 0.1*thdot^2 + 0.05*u^2)
    an_th = _angle_normalize(th)
    reward_out_ref[...] = -0.025 * (an_th * an_th
                                    + 0.1 * (thdot * thdot)
                                    + 0.05 * (u * u))


def pendulum_forward(state, action, return_costs=False):
    """state: (B, 2) f32, action: (B, 1) f32. Matches PendulumDynamics.forward."""
    B = state.shape[0]
    LANE = 128
    # Lane block width: multiple of 128, capped at 2048 lanes per grid step.
    bn = min(2048, pl.cdiv(B, LANE) * LANE)
    b_pad = pl.cdiv(B, bn) * bn
    pad = b_pad - B

    # Lane-dense layout: batch on the last axis; zero-pad the tail lanes.
    state_t = jnp.pad(state.astype(jnp.float32).T, ((0, 0), (0, pad)))
    action_t = jnp.pad(action.astype(jnp.float32).T, ((0, 0), (0, pad)))

    new_state_t, rewards_t = pl.pallas_call(
        _pendulum_kernel,
        out_shape=(
            jax.ShapeDtypeStruct((2, b_pad), jnp.float32),
            jax.ShapeDtypeStruct((1, b_pad), jnp.float32),
        ),
        grid=(b_pad // bn,),
        in_specs=[
            pl.BlockSpec((2, bn), lambda i: (0, i)),
            pl.BlockSpec((1, bn), lambda i: (0, i)),
        ],
        out_specs=(
            pl.BlockSpec((2, bn), lambda i: (0, i)),
            pl.BlockSpec((1, bn), lambda i: (0, i)),
        ),
        compiler_params=pltpu.CompilerParams(
            dimension_semantics=("parallel",)),
    )(state_t, action_t)

    new_state = new_state_t[:, :B].T          # back to (B, 2)
    if return_costs:
        rewards = rewards_t[0, :B]             # (B,), already negated in-kernel
        return new_state, rewards, None
    return new_state


def _reference_forward(state, action):
    # Plain-JAX reference mirroring the torch code exactly.
    th = state[:, 0:1]
    thdot = state[:, 1:2]
    g, m, l, dt = 10.0, 1.0, 1.0, 0.05
    u = action
    thetadoubledot = (-3 * g / (2 * l) * jnp.sin(th + math.pi)
                      + 3.0 / (m * l ** 2) * u)
    newthdot = thdot + thetadoubledot * dt
    newth = th + newthdot * dt

    def ang(x):
        return jnp.mod(x + math.pi, 2 * math.pi) - math.pi

    new_state = jnp.concatenate((ang(newth), newthdot), axis=1)
    costs = 0.5 * (ang(th) ** 2 + 0.1 * thdot ** 2 + 0.05 * u ** 2) / 20
    return new_state, -costs.squeeze(axis=-1)


if __name__ == "__main__":
    key = jax.random.PRNGKey(0)
    k1, k2 = jax.random.split(key)

    batch_size = 8
    # like reset(): th in [-pi, pi), thdot in [-8, 8)
    state = jax.random.uniform(k1, (batch_size, 2), jnp.float32) * 2.0 - 1.0
    state = state * jnp.array([math.pi, 8.0], dtype=jnp.float32)
    action = (jax.random.uniform(k2, (batch_size, 1), jnp.float32) * 2.0 - 1.0) * 2.0

    new_state, rewards, _ = pendulum_forward(state, action, return_costs=True)
    jax.block_until_ready((new_state, rewards))

    ref_state, ref_rewards = _reference_forward(state, action)
    assert new_state.shape == (batch_size, 2)
    assert rewards.shape == (batch_size,)
    assert jnp.allclose(new_state, ref_state, atol=1e-5, rtol=1e-5)
    assert jnp.allclose(rewards, ref_rewards, atol=1e-5, rtol=1e-5)

    # also check return_costs=False path
    only_state = pendulum_forward(state, action, return_costs=False)
    jax.block_until_ready(only_state)
    assert jnp.allclose(only_state, ref_state, atol=1e-5, rtol=1e-5)

    print("KERNEL_OK")
</pallas_src>

<mosaic_0001>
module attributes {stable_mosaic.version = 11 : i64} {
  func.func @_pendulum_kernel(%arg0: i32, %arg1: memref<2x128xf32, #tpu.memory_space<vmem>>, %arg2: memref<1x128xf32, #tpu.memory_space<vmem>>, %arg3: memref<2x128xf32, #tpu.memory_space<vmem>>, %arg4: memref<1x128xf32, #tpu.memory_space<vmem>>) attributes {dimension_semantics = [#tpu.dimension_semantics<parallel>], iteration_bounds = array<i64: 1>, scalar_prefetch = 0 : i64, scratch_operands = 0 : i64, tpu.core_type = #tpu.core_type<tc>, window_params = [{transform_indices = @transform_0, window_bounds = array<i64: 2, 128>}, {transform_indices = @transform_1, window_bounds = array<i64: 1, 128>}, {transform_indices = @transform_2, window_bounds = array<i64: 2, 128>}, {transform_indices = @transform_3, window_bounds = array<i64: 1, 128>}]} {
    %c0 = arith.constant 0 : index
    %c0_0 = arith.constant 0 : index
    %0 = vector.load %arg1[%c0, %c0_0] : memref<2x128xf32, #tpu.memory_space<vmem>>, vector<1x128xf32>
    %c1 = arith.constant 1 : index
    %c0_1 = arith.constant 0 : index
    %1 = vector.load %arg1[%c1, %c0_1] : memref<2x128xf32, #tpu.memory_space<vmem>>, vector<1x128xf32>
    %c0_2 = arith.constant 0 : index
    %c0_3 = arith.constant 0 : index
    %2 = vector.load %arg2[%c0_2, %c0_3] : memref<1x128xf32, #tpu.memory_space<vmem>>, vector<1x128xf32>
    %3 = math.sin %0 : vector<1x128xf32>
    %cst = arith.constant 7.500000e-01 : f32
    %4 = vector.broadcast %cst : f32 to vector<1x128xf32>
    %5 = arith.mulf %4, %3 : vector<1x128xf32>
    %6 = arith.addf %1, %5 : vector<1x128xf32>
    %cst_4 = arith.constant 1.500000e-01 : f32
    %7 = vector.broadcast %cst_4 : f32 to vector<1x128xf32>
    %8 = arith.mulf %7, %2 : vector<1x128xf32>
    %9 = arith.addf %6, %8 : vector<1x128xf32>
    %cst_5 = arith.constant 5.000000e-02 : f32
    %10 = vector.broadcast %cst_5 : f32 to vector<1x128xf32>
    %11 = arith.mulf %9, %10 : vector<1x128xf32>
    %12 = arith.addf %0, %11 : vector<1x128xf32>
    %cst_6 = arith.constant 3.14159274 : f32
    %13 = vector.broadcast %cst_6 : f32 to vector<1x128xf32>
    %14 = arith.addf %12, %13 : vector<1x128xf32>
    %cst_7 = arith.constant 0.159154937 : f32
    %15 = vector.broadcast %cst_7 : f32 to vector<1x128xf32>
    %16 = arith.mulf %14, %15 : vector<1x128xf32>
    %17 = math.floor %16 : vector<1x128xf32>
    %cst_8 = arith.constant 6.28318548 : f32
    %18 = vector.broadcast %cst_8 : f32 to vector<1x128xf32>
    %19 = arith.mulf %18, %17 : vector<1x128xf32>
    %20 = arith.subf %12, %19 : vector<1x128xf32>
    %21 = tpu.concatenate %20, %9 in 0 : vector<1x128xf32>, vector<1x128xf32> -> vector<2x128xf32>
    %c0_9 = arith.constant 0 : index
    %c0_10 = arith.constant 0 : index
    %22 = vector.load %arg3[%c0_9, %c0_10] : memref<2x128xf32, #tpu.memory_space<vmem>>, vector<2x128xf32>
    tpu.vector_store %arg3[%c0_9, %c0_10], %21 {strides = array<i32>} : memref<2x128xf32, #tpu.memory_space<vmem>>, vector<2x128xf32>,
    %cst_11 = arith.constant 3.14159274 : f32
    %23 = vector.broadcast %cst_11 : f32 to vector<1x128xf32>
    %24 = arith.addf %0, %23 : vector<1x128xf32>
    %cst_12 = arith.constant 0.159154937 : f32
    %25 = vector.broadcast %cst_12 : f32 to vector<1x128xf32>
    %26 = arith.mulf %24, %25 : vector<1x128xf32>
    %27 = math.floor %26 : vector<1x128xf32>
    %cst_13 = arith.constant 6.28318548 : f32
    %28 = vector.broadcast %cst_13 : f32 to vector<1x128xf32>
    %29 = arith.mulf %28, %27 : vector<1x128xf32>
    %30 = arith.subf %0, %29 : vector<1x128xf32>
    %31 = arith.mulf %30, %30 : vector<1x128xf32>
    %32 = arith.mulf %1, %1 : vector<1x128xf32>
    %cst_14 = arith.constant 1.000000e-01 : f32
    %33 = vector.broadcast %cst_14 : f32 to vector<1x128xf32>
    %34 = arith.mulf %33, %32 : vector<1x128xf32>
    %35 = arith.addf %31, %34 : vector<1x128xf32>
    %36 = arith.mulf %2, %2 : vector<1x128xf32>
    %cst_15 = arith.constant 5.000000e-02 : f32
    %37 = vector.broadcast %cst_15 : f32 to vector<1x128xf32>
    %38 = arith.mulf %37, %36 : vector<1x128xf32>
    %39 = arith.addf %35, %38 : vector<1x128xf32>
    %cst_16 = arith.constant -2.500000e-02 : f32
    %40 = vector.broadcast %cst_16 : f32 to vector<1x128xf32>
    %41 = arith.mulf %40, %39 : vector<1x128xf32>
    %c0_17 = arith.constant 0 : index
    %c0_18 = arith.constant 0 : index
    %42 = vector.load %arg4[%c0_17, %c0_18] : memref<1x128xf32, #tpu.memory_space<vmem>>, vector<1x128xf32>
    tpu.vector_store %arg4[%c0_17, %c0_18], %41 {strides = array<i32>} : memref<1x128xf32, #tpu.memory_space<vmem>>, vector<1x128xf32>,
    return
  }
  func.func @transform_0(%arg0: i32) -> (i32, i32) {
    %c0_i32 = arith.constant 0 : i32
    %c0_i32_0 = arith.constant 0 : i32
    return %c0_i32, %arg0 : i32, i32
  }
  func.func @transform_1(%arg0: i32) -> (i32, i32) {
    %c0_i32 = arith.constant 0 : i32
    %c0_i32_0 = arith.constant 0 : i32
    return %c0_i32, %arg0 : i32, i32
  }
  func.func @transform_2(%arg0: i32) -> (i32, i32) {
    %c0_i32 = arith.constant 0 : i32
    %c0_i32_0 = arith.constant 0 : i32
    return %c0_i32, %arg0 : i32, i32
  }
  func.func @transform_3(%arg0: i32) -> (i32, i32) {
    %c0_i32 = arith.constant 0 : i32
    %c0_i32_0 = arith.constant 0 : i32
    return %c0_i32, %arg0 : i32, i32
  }
}

</mosaic_0001>

<llo_original>
// kernel: tpu_custom_call.1
$region0: #{tpu_custom_call.1}
  #allocation0 [shape = 'u32[]', space=smem, size = 0x4, offset = 0x4, fixed_abs, tag = 'smem constant byte address 0x4 - core index']
  #allocation1 [shape = 'u32[72,128]{1,0:T(1,128)}', space=vmem, size = 0x9000, scoped, tag = 'internal scratch']
  %s0 = inlined_call_operand.hbm [shape: f32[2,128], index: 0, kind: input, shape index: {}]
  %s1 = inlined_call_operand.hbm [shape: f32[1,128], index: 1, kind: input, shape index: {}]
  %s2 = inlined_call_operand.hbm [shape: f32[2,128], index: 2, kind: output, shape index: {0}]
  %s3 = inlined_call_operand.hbm [shape: f32[1,128], index: 3, kind: output, shape index: {1}]
  %4 = xla_tuple %s2, %s3
  %s5 = sld [smem:[#allocation0]]
  $region34: #{tpu_custom_call.1} parent=0
    _
  %s7 = ssub.s32 1, %s5
  %s8 = scalar_select 0, %s7, %s5
  $region1: #{tpu_custom_call.1} parent=0
    #allocation2 [shape = 'u8[1024]{0}', space=vmem, size = 0x400, scoped, tag = 'input window, operand 0, single buffered']
    #allocation3 [shape = 's32[1]{0}', space=sflag, size = 0x4, scoped, tag = 'scoped memory for tpu_custom_call.1']
    #allocation4 [shape = 's32[1]{0}', space=sflag, size = 0x4, scoped, tag = 'scoped memory for tpu_custom_call.1']
    #allocation5 [shape = 'u8[512]{0}', space=vmem, size = 0x400, scoped, tag = 'input window, operand 1, single buffered']
    #allocation6 [shape = 's32[1]{0}', space=sflag, size = 0x4, scoped, tag = 'scoped memory for tpu_custom_call.1']
    #allocation7 [shape = 'u8[1024]{0}', space=vmem, size = 0x400, scoped, tag = 'output window, operand 0, single buffered']
    #allocation8 [shape = 'u8[512]{0}', space=vmem, size = 0x400, scoped, tag = 'output window, operand 1, single buffered']
    #allocation9 [shape = 's32[1]{0}', space=sflag, size = 0x4, scoped, tag = 'scoped memory for tpu_custom_call.1']
    %9 = vsyncpa [#allocation3], 0
    %10 = vsyncpa [#allocation6], 0
    %11 = vsyncpa [#allocation4], 0
    %12 = vsyncpa [#allocation9], 0
    // Predicated region
    $region2: #{tpu_custom_call.1} parent=1 // pred_check
      _
    $region3: #{tpu_custom_call.1} parent=1 // pred_check_branch
      %14 = sbr.rel (0) target = $region5
    $region4: #{tpu_custom_call.1} parent=1 // pred_region
      %16 = vsyncadd [#allocation3], 0
      %s18 = sshll.u32 %s0, 4
      %s19 = int_to_ptr.hbm [resolvable:$true] %s18
      %s20 = sshll.u32 [#allocation2], 4
      %s21 = int_to_ptr.vmem [resolvable:$true] %s20
      %23 = dma.hbm_to_vmem [thread:$0]  %s19, 32, %s21, [#allocation3]
    $region5: #{tpu_custom_call.1} parent=1 // pred_fallthru
      _
    // Predicated region
    $region6: #{tpu_custom_call.1} parent=1 // pred_check
      _
    $region7: #{tpu_custom_call.1} parent=1 // pred_check_branch
      %25 = sbr.rel (0) target = $region9
    $region8: #{tpu_custom_call.1} parent=1 // pred_region
      %27 = vsyncadd [#allocation6], 0
      %s29 = sshll.u32 %s1, 4
      %s30 = int_to_ptr.hbm [resolvable:$true] %s29
      %s31 = sshll.u32 [#allocation5], 4
      %s32 = int_to_ptr.vmem [resolvable:$true] %s31
      %34 = dma.hbm_to_vmem [thread:$0]  %s30, 16, %s32, [#allocation6]
    $region9: #{tpu_custom_call.1} parent=1 // pred_fallthru
      _
    // Predicated region
    $region10: #{tpu_custom_call.1} parent=1 // pred_check
      _
    $region11: #{tpu_custom_call.1} parent=1 // pred_check_branch
      %36 = sbr.rel (0) target = $region13
    $region12: #{tpu_custom_call.1} parent=1 // pred_region
      %38 = dma.done [#allocation3], 32
    $region13: #{tpu_custom_call.1} parent=1 // pred_fallthru
      _
    // Predicated region
    $region14: #{tpu_custom_call.1} parent=1 // pred_check
      _
    $region15: #{tpu_custom_call.1} parent=1 // pred_check_branch
      %40 = sbr.rel (0) target = $region17
    $region16: #{tpu_custom_call.1} parent=1 // pred_region
      %42 = dma.done [#allocation6], 16
    $region17: #{tpu_custom_call.1} parent=1 // pred_fallthru
      _
    %v43 = vld [vmem:[#allocation2] sm:$0x1]
    %v44 = vld [vmem:[#allocation2 + $0x1] sm:$0x1]
    %v45 = vld [vmem:[#allocation5] sm:$0x1]
    %v46 = vand.u32 2147483647, %v43
    %vm47 = vcmp.le.f32.partialorder %v46, 0.7853982
    %vm48 = vcmp.lt.s32.totalorder %v43, 0
    %v49 = vand.u32 %v43, 2139095040
    %v50 = vshrl.u32 %v49, 23
    %v51 = vsub.s32 %v50, 127
    %v52 = vand.u32 2147483647, %v43
    %v53 = vand.u32 %v52, 8388607
    %v54 = vor.u32 %v53, 8388608
    %v55 = vsub.s32 0, %v54
    %v56 = vadd.s32 %v51, 1
    %vm57 = vcmp.gt.s32.totalorder %v56, 0
    %v58 = vsel %vm57, %v56, 0
    %v59 = vshrl.u32 %v58, 5
    %v60 = vand.u32 %v58, 31
    %v61 = vsub.s32 32, %v60
    %v62 = vshrl.u32 683565275, %v61
    %v63 = vshll.u32 683565275, %v60
    %v64 = vshrl.u32 2475754826, %v61
    %v65 = vor.u32 %v63, %v64
    %v66 = vshll.u32 2475754826, %v60
    %v67 = vshrl.u32 2131351028, %v61
    %v68 = vor.u32 %v66, %v67
    %v69 = vshll.u32 2131351028, %v60
    %v70 = vshrl.u32 2102212464, %v61
    %v71 = vor.u32 %v69, %v70
    %v72 = vshll.u32 2102212464, %v60
    %v73 = vshrl.u32 920167782, %v61
    %v74 = vor.u32 %v72, %v73
    %v75 = vshll.u32 920167782, %v60
    %v76 = vshrl.u32 1326507024, %v61
    %v77 = vor.u32 %v75, %v76
    %vm78 = vcmp.lt.s32.totalorder %v59, 1
    %vm79 = vcmp.lt.s32.totalorder %v59, 2
    %vm80 = vcmp.lt.s32.totalorder %v59, 3
    %vm81 = vcmp.lt.s32.totalorder %v59, 4
    %v82 = vsel %vm78, %v62, %v65
    %v83 = vsel %vm81, %v71, 2102212464
    %v84 = vsel %vm80, %v68, %v83
    %v85 = vsel %vm79, %v82, %v84
    %v86 = vsel %vm78, %v65, %v68
    %v87 = vsel %vm81, %v74, 920167782
    %v88 = vsel %vm80, %v71, %v87
    %v89 = vsel %vm79, %v86, %v88
    %v90 = vsel %vm78, %v68, %v71
    %v91 = vsel %vm81, %v77, 1326507024
    %v92 = vsel %vm80, %v74, %v91
    %v93 = vsel %vm79, %v90, %v92
    %v94 = vshll.u32 %v54, 8
    %v95 = vand.u32 %v94, 65535
    %v96 = vshrl.u32 %v94, 16
    %v97 = vand.u32 %v93, 65535
    %v98 = vshrl.u32 %v93, 16
    %v99 = vmul.u32 %v95, %v97
    %v100 = vmul.u32 %v95, %v98
    %v101 = vmul.u32 %v96, %v97
    %v102 = vmul.u32 %v96, %v98
    %v103 = vshll.u32 %v100, 16
    %v104 = vshrl.u32 %v100, 16
    %v105 = vshll.u32 %v101, 16
    %v106 = vshrl.u32 %v101, 16
    %vm107 = vc.u32 %v99, %v103
    %v108 = vsel %vm107, 1, 0
    %v109 = vadd.s32 %v99, %v103
    %v110 = vadd.s32 %v102, %v108
    %vm111 = vc.u32 %v109, %v105
    %v112 = vsel %vm111, 1, 0
    %v113 = vadd.s32 %v109, %v105
    %v114 = vadd.s32 %v110, %v112
    %v115 = vadd.s32 %v114, %v104
    %v116 = vadd.s32 %v115, %v106
    %v117 = vand.u32 %v94, 65535
    %v118 = vshrl.u32 %v94, 16
    %v119 = vand.u32 %v89, 65535
    %v120 = vshrl.u32 %v89, 16
    %v121 = vmul.u32 %v117, %v119
    %v122 = vmul.u32 %v117, %v120
    %v123 = vmul.u32 %v118, %v119
    %v124 = vmul.u32 %v118, %v120
    %v125 = vshll.u32 %v122, 16
    %v126 = vshrl.u32 %v122, 16
    %v127 = vshll.u32 %v123, 16
    %v128 = vshrl.u32 %v123, 16
    %vm129 = vc.u32 %v121, %v125
    %v130 = vsel %vm129, 1, 0
    %v131 = vadd.s32 %v121, %v125
    %v132 = vadd.s32 %v124, %v130
    %vm133 = vc.u32 %v131, %v127
    %v134 = vsel %vm133, 1, 0
    %v135 = vadd.s32 %v131, %v127
    %v136 = vadd.s32 %v132, %v134
    %v137 = vadd.s32 %v136, %v126
    %v138 = vadd.s32 %v137, %v128
    %v139 = vmul.u32 %v94, %v85
    %v140 = vadd.s32 %v116, %v135
    %vm141 = vc.u32 %v116, %v135
    %v142 = vadd.s32 %v138, 1
    %v143 = vsel %vm141, %v142, %v138
    %v144 = vadd.s32 %v139, %v143
    %v145 = vadd.s32 %v144, 536870912
    %v146 = vshrl.u32 %v145, 30
    %v147 = vshll.u32 %v146, 30
    %v148 = vsub.s32 %v144, %v147
    %vm149 = vcmp.lt.s32.totalorder %v148, 0
    %v150 = vsub.s32 0, %v148
    %v151 = vsel %vm149, %v150, %v148
    %v152 = vclz %v151
    %v153 = vsub.s32 %v152, 2
    %vm154 = vcmp.gt.s32.totalorder 0, %v153
    %v155 = vsel %vm154, 0, %v153
    %v156 = vsub.s32 32, %v155
    %v157 = vshll.u32 %v148, %v155
    %v158 = vshrl.u32 %v140, %v156
    %v159 = vor.u32 %v157, %v158
    %v160 = vsub.s32 4294967266, %v155
    %v161 = vadd.s32 %v160, 127
    %v162 = vshll.u32 %v161, 23
    %v163 = vor.u32 4788187, %v162
    %v164 = vand.u32 2147483647, %v163
    %v166 = vcvt.s32.f32 %v159
    %v167 = vmul.f32 %v166, %v164
    %v168 = vxor.u32 %v167, 2147483648
    %v169 = vsel %vm48, %v168, %v167
    %v170 = vsub.s32 4, %v146
    %v171 = vsel %vm48, %v170, %v146
    %v172 = vsel %vm47, %v43, %v169
    %v173 = vsel %vm47, 0, %v171
    %v174 = vmul.f32 %v172, %v172
    %v175 = vmul.f32 %v174, -0.001358992
    %v176 = vadd.f32 %v175, 0.041655596
    %v177 = vmul.f32 %v174, %v176
    %v178 = vadd.f32 %v177, -0.4999988
    %v179 = vmul.f32 %v174, %v178
    %v180 = vadd.f32 1.0, %v179
    %v181 = vmul.f32 %v172, %v172
    %v182 = vmul.f32 %v181, -0.00019511016
    %v183 = vadd.f32 %v182, 0.008332121
    %v184 = vmul.f32 %v181, %v183
    %v185 = vadd.f32 %v184, -0.16666654
    %v186 = vmul.f32 %v181, %v185
    %v187 = vadd.f32 %v186, 1.0
    %v188 = vmul.f32 %v187, %v172
    %vm189 = vweird.f32 %v43
    %v190 = vadd.s32 %v173, 3
    %v191 = vand.u32 %v190, 3
    %vm192 = vcmp.lt.s32.totalorder %v191, 2
    %vm193 = vcmp.eq.s32.totalorder %v191, 0
    %v194 = vxor.u32 %v188, 2147483648
    %v195 = vsel %vm193, %v180, %v194
    %vm196 = vcmp.eq.s32.totalorder %v191, 2
    %v197 = vxor.u32 %v180, 2147483648
    %v198 = vsel %vm196, %v197, %v188
    %v199 = vsel %vm192, %v195, %v198
    %v200 = vsel %vm189, nan, %v199
    %v201 = vmul.f32 %v200, 0.75
    %v202 = vadd.f32 %v44, %v201
    %v203 = vmul.f32 %v45, 0.15
    %v204 = vadd.f32 %v202, %v203
    %v205 = vmul.f32 %v204, 0.05
    %v206 = vadd.f32 %v43, %v205
    %v207 = vadd.f32 %v206, 3.1415927
    %v208 = vmul.f32 %v207, 0.15915494
    %v209 = vfloor.f32 %v208
    %v210 = vmul.f32 %v209, 6.2831855
    %v211 = vsub.f32 %v206, %v210
    %v213 = vrot.slane %v204, 7
    %vm215 = vcmask 1040384
    %v216 = vsel %vm215, %v211, %v213
    %217 = vst [vmem:[#allocation7] sm:$0x3] %v216
    %v218 = vadd.f32 %v43, 3.1415927
    %v219 = vmul.f32 %v218, 0.15915494
    %v220 = vfloor.f32 %v219
    %v221 = vmul.f32 %v220, 6.2831855
    %v222 = vsub.f32 %v43, %v221
    %v223 = vmul.f32 %v222, %v222
    %v224 = vmul.f32 %v44, %v44
    %v225 = vmul.f32 %v224, 0.1
    %v226 = vadd.f32 %v223, %v225
    %v227 = vmul.f32 %v45, %v45
    %v228 = vmul.f32 %v227, 0.05
    %v229 = vadd.f32 %v226, %v228
    %v230 = vmul.f32 %v229, -0.025
    %231 = vst [vmem:[#allocation8] sm:$0x1] %v230
    // Predicated region
    $region18: #{tpu_custom_call.1} parent=1 // pred_check
      _
    $region19: #{tpu_custom_call.1} parent=1 // pred_check_branch
      %233 = sbr.rel (0) target = $region21
    $region20: #{tpu_custom_call.1} parent=1 // pred_region
      %235 = vsyncadd [#allocation4], 0
      %s237 = sshll.u32 [#allocation7], 4
      %s238 = int_to_ptr.vmem [resolvable:$true] %s237
      %s239 = sshll.u32 %s2, 4
      %s240 = int_to_ptr.hbm [resolvable:$true] %s239
      %242 = dma.vmem_to_hbm [thread:$0]  %s238, 32, %s240, [#allocation4]
    $region21: #{tpu_custom_call.1} parent=1 // pred_fallthru
      _
    // Predicated region
    $region22: #{tpu_custom_call.1} parent=1 // pred_check
      _
    $region23: #{tpu_custom_call.1} parent=1 // pred_check_branch
      %244 = sbr.rel (0) target = $region25
    $region24: #{tpu_custom_call.1} parent=1 // pred_region
      %246 = vsyncadd [#allocation9], 0
      %s248 = sshll.u32 [#allocation8], 4
      %s249 = int_to_ptr.vmem [resolvable:$true] %s248
      %s250 = sshll.u32 %s3, 4
      %s251 = int_to_ptr.hbm [resolvable:$true] %s250
      %253 = dma.vmem_to_hbm [thread:$0]  %s249, 16, %s251, [#allocation9]
    $region25: #{tpu_custom_call.1} parent=1 // pred_fallthru
      _
    // Predicated region
    $region26: #{tpu_custom_call.1} parent=1 // pred_check
      _
    $region27: #{tpu_custom_call.1} parent=1 // pred_check_branch
      %255 = sbr.rel (0) target = $region29
    $region28: #{tpu_custom_call.1} parent=1 // pred_region
      %257 = dma.done [#allocation4], 32
    $region29: #{tpu_custom_call.1} parent=1 // pred_fallthru
      _
    // Predicated region
    $region30: #{tpu_custom_call.1} parent=1 // pred_check
      _
    $region31: #{tpu_custom_call.1} parent=1 // pred_check_branch
      %259 = sbr.rel (0) target = $region33
    $region32: #{tpu_custom_call.1} parent=1 // pred_region
      %261 = dma.done [#allocation9], 16
    $region33: #{tpu_custom_call.1} parent=1 // pred_fallthru
      _
    %262 = vsyncpa [#allocation3], 1
    %263 = vsyncpa [#allocation6], 1
    %264 = vsyncpa [#allocation4], 1
    %265 = vsyncpa [#allocation9], 1

</llo_original>
